<compile_context>
chip_gen: v5e
topology: v5e:2x2
jax: 0.10.0
libtpu: 0.0.40
codegen_flags: <defaults>
</compile_context>

<pallas_src>
import jax
import jax.numpy as jnp
from jax.experimental import pallas as pl
from jax.experimental.pallas import tpu as pltpu


def _loss_kernel(pred_ref, tgt_ref, tn_ref, out_ref, minx_sc, mycol_sc, mae_sc):
    """grid = (j: target tile [outer, parallel], i: pred tile [inner]).

    Per j, accumulated across the inner i sweep and emitted at i == last:
      lane 0: sum_{b,n,d} |pred - target|          (MAE numerator)
      lane 1: sum_{b,col} sqrt(min_row d2)         (torch.min(dist, dim=1))
      lane 2: sum_{row,col} sqrt(min_batch d2)     (torch.min(dist, dim=0))
    """
    j = pl.program_id(0)
    i = pl.program_id(1)
    ni = pl.num_programs(1)

    B, tr, _ = pred_ref.shape
    tc = tgt_ref.shape[1]

    @pl.when(i == 0)
    def _():
        minx_sc[...] = jnp.full(minx_sc.shape, jnp.inf, jnp.float32)
        mycol_sc[...] = jnp.zeros(mycol_sc.shape, jnp.float32)

    b_iota = jax.lax.broadcasted_iota(jnp.int32, (B, tc), 0)   # hoisted

    def batch_step(b, miny, rowmins):
        p = pred_ref[b]                                  # (tr, D) native dtype
        t = tgt_ref[b]                                   # (tc, D)
        cross = jax.lax.dot_general(                     # MXU, f32 accumulation
            p, t, dimension_numbers=(((1,), (1,)), ((), ())),
            preferred_element_type=jnp.float32)          # (tr, tc)
        p32 = p.astype(jnp.float32)
        pn = jnp.sum(p32 * p32, axis=-1, keepdims=True)  # (tr, 1), in-kernel
        d2 = pn + tn_ref[b] - 2.0 * cross                # (tr, tc) squared dist
        miny = jnp.minimum(miny, d2)                     # running min over batch
        rmin = jnp.min(d2, axis=0, keepdims=True)        # (1, tc) min over rows
        rowmins = jnp.where(b_iota == b,
                            jnp.broadcast_to(rmin, (B, tc)), rowmins)
        return miny, rowmins

    miny = jnp.full((tr, tc), jnp.inf, jnp.float32)
    rowmins = jnp.full((B, tc), jnp.inf, jnp.float32)
    if B <= 8:                       # short fixed trip count -> unroll statically
        for b in range(B):
            miny, rowmins = batch_step(b, miny, rowmins)
    else:
        miny, rowmins = jax.lax.fori_loop(
            0, B, lambda b, c: batch_step(b, *c), (miny, rowmins))

    # min over batch is fully resolved for this (i, j) tile: clamp the reduced
    # values (max(.,0) commutes with min), sqrt, fold into lane-wide partials.
    mycol_sc[...] += jnp.sum(jnp.sqrt(jnp.maximum(miny, 0.0)),
                             axis=0, keepdims=True)

    # running min over pred-row tiles (axis i), per (batch, target column).
    minx_sc[...] = jnp.minimum(minx_sc[...], rowmins)

    # MAE: only the aligned diagonal tile pairs matching elements.
    @pl.when(i == j)
    def _():
        ad = jnp.abs(pred_ref[...].astype(jnp.float32)
                     - tgt_ref[...].astype(jnp.float32))        # (B, tr, D)
        mae_sc[...] = jnp.sum(jnp.sum(ad, axis=0), keepdims=True)

    # finalize this j: single cross-lane reductions + lane-dense (8,128) emit.
    @pl.when(i == ni - 1)
    def _():
        mx = jnp.sum(jnp.sqrt(jnp.maximum(minx_sc[...], 0.0)))
        my = jnp.sum(mycol_sc[...])
        lane = jax.lax.broadcasted_iota(jnp.int32, out_ref.shape, 1)
        out_ref[...] = (jnp.where(lane == 0, mae_sc[...], 0.0)
                        + jnp.where(lane == 1, mx, 0.0)
                        + jnp.where(lane == 2, my, 0.0))


def _pick_tile(n, cap=128):
    """Largest multiple-of-8 divisor of n, capped at `cap` (128 checked first).
    Falls back to the full extent, which is always a legal block."""
    if n <= cap:
        return n
    for t in range(cap - cap % 8, 7, -8):
        if n % t == 0:
            return t
    # TODO(synk): pad+mask path for awkward N; the full-extent fallback keeps
    # an (N, N) distance tile live and is only OK for modest N.
    return n


def custom_loss(pred, target, alpha=1.0, beta=1.0, gamma=1.0, max_tile=128):
    """Pallas implementation of CustomLoss.forward.  Returns a (B,) vector,
    matching the PyTorch broadcast of scalar MAE/Chamfer with per-batch EMD."""
    B, N, D = pred.shape
    tile = _pick_tile(N, max_tile)
    nt = N // tile

    tf = target.astype(jnp.float32)
    tn = jnp.sum(tf * tf, axis=-1)[:, None, :]           # (B, 1, N), lane-dense

    part = pl.pallas_call(
        _loss_kernel,
        out_shape=jax.ShapeDtypeStruct((nt, 8, 128), jnp.float32),
        grid=(nt, nt),                                    # (j, i) — i innermost
        in_specs=[
            pl.BlockSpec((B, tile, D), lambda j, i: (0, i, 0)),   # pred rows
            pl.BlockSpec((B, tile, D), lambda j, i: (0, j, 0)),   # target cols
            pl.BlockSpec((B, 1, tile), lambda j, i: (0, 0, j)),   # |target|^2
        ],
        out_specs=pl.BlockSpec((None, 8, 128), lambda j, i: (j, 0, 0)),
        scratch_shapes=[
            pltpu.VMEM((B, tile), jnp.float32),    # running row-min per (b, col)
            pltpu.VMEM((1, tile), jnp.float32),    # column sums of sqrt(min_b d2)
            pltpu.VMEM((1, 1), jnp.float32),       # per-j MAE partial
        ],
        compiler_params=pltpu.CompilerParams(
            dimension_semantics=("parallel", "arbitrary"),
            vmem_limit_bytes=32 * 1024 * 1024,
        ),
    )(pred, target, tn)

    sums = jnp.sum(part[:, 0, :3], axis=0)                # combine per-j partials
    mae = sums[0] / float(B * N * D)
    chamfer = sums[1] / float(B * N) + sums[2] / float(N * N)

    # TODO(synk): no clean Pallas TPU sort primitive; the per-batch sort for the
    # 1-D Wasserstein (EMD) term stays in plain JAX (fused with its |diff| mean).
    pf = pred.astype(jnp.float32)
    ps = jnp.sort(pf.reshape(B, N * D), axis=-1)
    ts = jnp.sort(tf.reshape(B, N * D), axis=-1)
    emd = jnp.mean(jnp.abs(ps - ts), axis=-1)             # (B,)

    return alpha * mae + beta * chamfer + gamma * emd     # (B,)


def reference_loss(pred, target, alpha=1.0, beta=1.0, gamma=1.0):
    """Pure-JAX replica of the PyTorch forward (for verification)."""
    pred = pred.astype(jnp.float32)
    target = target.astype(jnp.float32)
    mae = jnp.mean(jnp.abs(pred - target))
    diff = pred[:, :, None, :] - target[:, None, :, :]
    dist = jnp.sqrt(jnp.sum(diff * diff, axis=-1))
    chamfer = jnp.mean(jnp.min(dist, axis=1)) + jnp.mean(jnp.min(dist, axis=0))
    B = pred.shape[0]
    ps = jnp.sort(pred.reshape(B, -1), axis=-1)
    ts = jnp.sort(target.reshape(B, -1), axis=-1)
    emd = jnp.mean(jnp.abs(ps - ts), axis=-1)
    return alpha * mae + beta * chamfer + gamma * emd


if __name__ == "__main__":
    key = jax.random.PRNGKey(0)
    k1, k2, k3, k4 = jax.random.split(key, 4)

    # Case 1: tiny shape -> single-tile (1 x 1) grid.
    B, N, D = 2, 8, 32
    pred = jax.random.normal(k1, (B, N, D), dtype=jnp.float32)
    target = jax.random.normal(k2, (B, N, D), dtype=jnp.float32)
    out = jax.block_until_ready(custom_loss(pred, target))
    ref = reference_loss(pred, target)
    assert out.shape == (B,)
    assert jnp.allclose(out, ref, rtol=1e-3, atol=1e-3), (out, ref)

    # Case 2: multi-tile (2 x 2) grid, batch folded into the kernel body.
    B2, N2, D2 = 2, 256, 32
    pred2 = jax.random.normal(k3, (B2, N2, D2), dtype=jnp.float32)
    target2 = jax.random.normal(k4, (B2, N2, D2), dtype=jnp.float32)
    out2 = jax.block_until_ready(
        custom_loss(pred2, target2, alpha=0.5, beta=2.0, gamma=1.5))
    ref2 = reference_loss(pred2, target2, alpha=0.5, beta=2.0, gamma=1.5)
    assert out2.shape == (B2,)
    assert jnp.allclose(out2, ref2, rtol=1e-3, atol=1e-3), (out2, ref2)

    print("KERNEL_OK")
</pallas_src>

<mosaic_0001>
module attributes {stable_mosaic.version = 11 : i64} {
  func.func @_loss_kernel(%arg0: i32, %arg1: i32, %arg2: memref<2x8x32xf32, #tpu.memory_space<vmem>>, %arg3: memref<2x8x32xf32, #tpu.memory_space<vmem>>, %arg4: memref<2x1x8xf32, #tpu.memory_space<vmem>>, %arg5: memref<1x8x128xf32, #tpu.memory_space<vmem>>, %arg6: memref<2x8xf32, #tpu.memory_space<vmem>>, %arg7: memref<1x8xf32, #tpu.memory_space<vmem>>, %arg8: memref<1x1xf32, #tpu.memory_space<vmem>>) attributes {dimension_semantics = [#tpu.dimension_semantics<parallel>, #tpu.dimension_semantics<arbitrary>], iteration_bounds = array<i64: 1, 1>, scalar_prefetch = 0 : i64, scratch_operands = 3 : i64, tpu.core_type = #tpu.core_type<tc>, window_params = [{transform_indices = @transform_0, window_bounds = array<i64: 2, 8, 32>}, {transform_indices = @transform_1, window_bounds = array<i64: 2, 8, 32>}, {transform_indices = @transform_2, window_bounds = array<i64: 2, 1, 8>}, {transform_indices = @transform_3, window_bounds = array<i64: 1, 8, 128>}]} {
    %c0_i32 = arith.constant 0 : i32
    %0 = arith.cmpi eq, %arg1, %c0_i32 : i32
    %1 = arith.extui %0 : i1 to i32
    %c0_i32_0 = arith.constant 0 : i32
    %2 = arith.cmpi ne, %1, %c0_i32_0 : i32
    scf.if %2 {
      %cst_40 = arith.constant 0x7F800000 : f32
      %71 = vector.broadcast %cst_40 : f32 to vector<2x8xf32>
      %c0_41 = arith.constant 0 : index
      %c0_42 = arith.constant 0 : index
      %72 = vector.load %arg6[%c0_41, %c0_42] : memref<2x8xf32, #tpu.memory_space<vmem>>, vector<2x8xf32>
      tpu.vector_store %arg6[%c0_41, %c0_42], %71 {strides = array<i32>} : memref<2x8xf32, #tpu.memory_space<vmem>>, vector<2x8xf32>,
      %cst_43 = arith.constant 0.000000e+00 : f32
      %73 = vector.broadcast %cst_43 : f32 to vector<1x8xf32>
      %c0_44 = arith.constant 0 : index
      %c0_45 = arith.constant 0 : index
      %74 = vector.load %arg7[%c0_44, %c0_45] : memref<1x8xf32, #tpu.memory_space<vmem>>, vector<1x8xf32>
      tpu.vector_store %arg7[%c0_44, %c0_45], %73 {strides = array<i32>} : memref<1x8xf32, #tpu.memory_space<vmem>>, vector<1x8xf32>,
    } else {
    }
    %3 = tpu.iota {dimensions = array<i32: 0>} : vector<2x8xi32>
    %cst = arith.constant 0x7F800000 : f32
    %4 = vector.broadcast %cst : f32 to vector<8x8xf32>
    %cst_1 = arith.constant 0x7F800000 : f32
    %5 = vector.broadcast %cst_1 : f32 to vector<2x8xf32>
    %c0 = arith.constant 0 : index
    %c0_2 = arith.constant 0 : index
    %c0_3 = arith.constant 0 : index
    %6 = vector.load %arg2[%c0, %c0_2, %c0_3] : memref<2x8x32xf32, #tpu.memory_space<vmem>>, vector<1x8x32xf32>
    %7 = vector.shape_cast %6 : vector<1x8x32xf32> to vector<8x32xf32>
    %c0_4 = arith.constant 0 : index
    %c0_5 = arith.constant 0 : index
    %c0_6 = arith.constant 0 : index
    %8 = vector.load %arg3[%c0_4, %c0_5, %c0_6] : memref<2x8x32xf32, #tpu.memory_space<vmem>>, vector<1x8x32xf32>
    %9 = vector.shape_cast %8 : vector<1x8x32xf32> to vector<8x32xf32>
    %cst_7 = arith.constant dense<0.000000e+00> : vector<8x8xf32>
    %10 = tpu.matmul %7, %9, %cst_7 {dimension_numbers = #tpu.dot_dimension_numbers<[1], [1], [0], [0], [0, 0, 1, 0], [], []>} : vector<8x32xf32>, vector<8x32xf32>, vector<8x8xf32> -> vector<8x8xf32>
    %11 = arith.mulf %7, %7 : vector<8x32xf32>
    %cst_8 = arith.constant dense<0.000000e+00> : vector<8xf32>
    %12 = vector.multi_reduction <add>, %11, %cst_8 [1] : vector<8x32xf32> to vector<8xf32>
    %13 = vector.shape_cast %12 : vector<8xf32> to vector<8x1xf32>
    %c0_9 = arith.constant 0 : index
    %c0_10 = arith.constant 0 : index
    %c0_11 = arith.constant 0 : index
    %14 = vector.load %arg4[%c0_9, %c0_10, %c0_11] : memref<2x1x8xf32, #tpu.memory_space<vmem>>, vector<1x1x8xf32>
    %15 = vector.shape_cast %14 : vector<1x1x8xf32> to vector<1x8xf32>
    %16 = vector.broadcast %13 : vector<8x1xf32> to vector<8x8xf32>
    %17 = vector.broadcast %15 : vector<1x8xf32> to vector<8x8xf32>
    %18 = arith.addf %16, %17 : vector<8x8xf32>
    %cst_12 = arith.constant 2.000000e+00 : f32
    %19 = vector.broadcast %cst_12 : f32 to vector<8x8xf32>
    %20 = arith.mulf %19, %10 : vector<8x8xf32>
    %21 = arith.subf %18, %20 : vector<8x8xf32>
    %22 = arith.minimumf %4, %21 : vector<8x8xf32>
    %cst_13 = arith.constant dense<0x7F800000> : vector<8xf32>
    %23 = vector.multi_reduction <minimumf>, %21, %cst_13 [0] : vector<8x8xf32> to vector<8xf32>
    %24 = vector.shape_cast %23 : vector<8xf32> to vector<1x8xf32>
    %c0_i32_14 = arith.constant 0 : i32
    %25 = vector.broadcast %c0_i32_14 : i32 to vector<2x8xi32>
    %26 = arith.cmpi eq, %3, %25 : vector<2x8xi32>
    %27 = vector.shape_cast %24 : vector<1x8xf32> to vector<1x8xf32>
    %28 = vector.broadcast %27 : vector<1x8xf32> to vector<2x8xf32>
    %29 = arith.select %26, %28, %5 : vector<2x8xi1>, vector<2x8xf32>
    %c1 = arith.constant 1 : index
    %c0_15 = arith.constant 0 : index
    %c0_16 = arith.constant 0 : index
    %30 = vector.load %arg2[%c1, %c0_15, %c0_16] : memref<2x8x32xf32, #tpu.memory_space<vmem>>, vector<1x8x32xf32>
    %31 = vector.shape_cast %30 : vector<1x8x32xf32> to vector<8x32xf32>
    %c1_17 = arith.constant 1 : index
    %c0_18 = arith.constant 0 : index
    %c0_19 = arith.constant 0 : index
    %32 = vector.load %arg3[%c1_17, %c0_18, %c0_19] : memref<2x8x32xf32, #tpu.memory_space<vmem>>, vector<1x8x32xf32>
    %33 = vector.shape_cast %32 : vector<1x8x32xf32> to vector<8x32xf32>
    %cst_20 = arith.constant dense<0.000000e+00> : vector<8x8xf32>
    %34 = tpu.matmul %31, %33, %cst_20 {dimension_numbers = #tpu.dot_dimension_numbers<[1], [1], [0], [0], [0, 0, 1, 0], [], []>} : vector<8x32xf32>, vector<8x32xf32>, vector<8x8xf32> -> vector<8x8xf32>
    %35 = arith.mulf %31, %31 : vector<8x32xf32>
    %cst_21 = arith.constant dense<0.000000e+00> : vector<8xf32>
    %36 = vector.multi_reduction <add>, %35, %cst_21 [1] : vector<8x32xf32> to vector<8xf32>
    %37 = vector.shape_cast %36 : vector<8xf32> to vector<8x1xf32>
    %c1_22 = arith.constant 1 : index
    %c0_23 = arith.constant 0 : index
    %c0_24 = arith.constant 0 : index
    %38 = vector.load %arg4[%c1_22, %c0_23, %c0_24] : memref<2x1x8xf32, #tpu.memory_space<vmem>>, vector<1x1x8xf32>
    %39 = vector.shape_cast %38 : vector<1x1x8xf32> to vector<1x8xf32>
    %40 = vector.broadcast %37 : vector<8x1xf32> to vector<8x8xf32>
    %41 = vector.broadcast %39 : vector<1x8xf32> to vector<8x8xf32>
    %42 = arith.addf %40, %41 : vector<8x8xf32>
    %cst_25 = arith.constant 2.000000e+00 : f32
    %43 = vector.broadcast %cst_25 : f32 to vector<8x8xf32>
    %44 = arith.mulf %43, %34 : vector<8x8xf32>
    %45 = arith.subf %42, %44 : vector<8x8xf32>
    %46 = arith.minimumf %22, %45 : vector<8x8xf32>
    %cst_26 = arith.constant dense<0x7F800000> : vector<8xf32>
    %47 = vector.multi_reduction <minimumf>, %45, %cst_26 [0] : vector<8x8xf32> to vector<8xf32>
    %48 = vector.shape_cast %47 : vector<8xf32> to vector<1x8xf32>
    %c1_i32 = arith.constant 1 : i32
    %49 = vector.broadcast %c1_i32 : i32 to vector<2x8xi32>
    %50 = arith.cmpi eq, %3, %49 : vector<2x8xi32>
    %51 = vector.shape_cast %48 : vector<1x8xf32> to vector<1x8xf32>
    %52 = vector.broadcast %51 : vector<1x8xf32> to vector<2x8xf32>
    %53 = arith.select %50, %52, %29 : vector<2x8xi1>, vector<2x8xf32>
    %c0_27 = arith.constant 0 : index
    %c0_28 = arith.constant 0 : index
    %54 = vector.load %arg7[%c0_27, %c0_28] : memref<1x8xf32, #tpu.memory_space<vmem>>, vector<1x8xf32>
    %cst_29 = arith.constant 0.000000e+00 : f32
    %55 = vector.broadcast %cst_29 : f32 to vector<8x8xf32>
    %56 = arith.maximumf %46, %55 : vector<8x8xf32>
    %57 = math.sqrt %56 : vector<8x8xf32>
    %cst_30 = arith.constant dense<0.000000e+00> : vector<8xf32>
    %58 = vector.multi_reduction <add>, %57, %cst_30 [0] : vector<8x8xf32> to vector<8xf32>
    %59 = vector.shape_cast %58 : vector<8xf32> to vector<1x8xf32>
    %60 = arith.addf %54, %59 : vector<1x8xf32>
    %c0_31 = arith.constant 0 : index
    %c0_32 = arith.constant 0 : index
    %61 = vector.load %arg7[%c0_31, %c0_32] : memref<1x8xf32, #tpu.memory_space<vmem>>, vector<1x8xf32>
    tpu.vector_store %arg7[%c0_31, %c0_32], %60 {strides = array<i32>} : memref<1x8xf32, #tpu.memory_space<vmem>>, vector<1x8xf32>,
    %c0_33 = arith.constant 0 : index
    %c0_34 = arith.constant 0 : index
    %62 = vector.load %arg6[%c0_33, %c0_34] : memref<2x8xf32, #tpu.memory_space<vmem>>, vector<2x8xf32>
    %63 = arith.minimumf %62, %53 : vector<2x8xf32>
    %c0_35 = arith.constant 0 : index
    %c0_36 = arith.constant 0 : index
    %64 = vector.load %arg6[%c0_35, %c0_36] : memref<2x8xf32, #tpu.memory_space<vmem>>, vector<2x8xf32>
    tpu.vector_store %arg6[%c0_35, %c0_36], %63 {strides = array<i32>} : memref<2x8xf32, #tpu.memory_space<vmem>>, vector<2x8xf32>,
    %65 = arith.cmpi eq, %arg1, %arg0 : i32
    %66 = arith.extui %65 : i1 to i32
    %c0_i32_37 = arith.constant 0 : i32
    %67 = arith.cmpi ne, %66, %c0_i32_37 : i32
    scf.if %67 {
      %c0_40 = arith.constant 0 : index
      %c0_41 = arith.constant 0 : index
      %c0_42 = arith.constant 0 : index
      %71 = vector.load %arg2[%c0_40, %c0_41, %c0_42] : memref<2x8x32xf32, #tpu.memory_space<vmem>>, vector<2x8x32xf32>
      %c0_43 = arith.constant 0 : index
      %c0_44 = arith.constant 0 : index
      %c0_45 = arith.constant 0 : index
      %72 = vector.load %arg3[%c0_43, %c0_44, %c0_45] : memref<2x8x32xf32, #tpu.memory_space<vmem>>, vector<2x8x32xf32>
      %73 = arith.subf %71, %72 : vector<2x8x32xf32>
      %74 = math.absf %73 : vector<2x8x32xf32>
      %cst_46 = arith.constant dense<0.000000e+00> : vector<8x32xf32>
      %75 = vector.multi_reduction <add>, %74, %cst_46 [0] : vector<2x8x32xf32> to vector<8x32xf32>
      %76 = vector.shape_cast %75 : vector<8x32xf32> to vector<1x8x32xf32>
      %cst_47 = arith.constant dense<0.000000e+00> : vector<1xf32>
      %77 = vector.multi_reduction <add>, %76, %cst_47 [1, 2] : vector<1x8x32xf32> to vector<1xf32>
      %78 = vector.shape_cast %77 : vector<1xf32> to vector<1x1x1xf32>
      %79 = vector.extract %78[0, 0, 0] : f32 from vector<1x1x1xf32>
      %80 = vector.broadcast %79 : f32 to vector<1x1xf32>
      %c0_48 = arith.constant 0 : index
      %c0_49 = arith.constant 0 : index
      %81 = vector.load %arg8[%c0_48, %c0_49] : memref<1x1xf32, #tpu.memory_space<vmem>>, vector<1x1xf32>
      tpu.vector_store %arg8[%c0_48, %c0_49], %80 {strides = array<i32>} : memref<1x1xf32, #tpu.memory_space<vmem>>, vector<1x1xf32>,
    } else {
    }
    %c0_i32_38 = arith.constant 0 : i32
    %68 = arith.cmpi eq, %arg1, %c0_i32_38 : i32
    %69 = arith.extui %68 : i1 to i32
    %c0_i32_39 = arith.constant 0 : i32
    %70 = arith.cmpi ne, %69, %c0_i32_39 : i32
    scf.if %70 {
      %c0_40 = arith.constant 0 : index
      %c0_41 = arith.constant 0 : index
      %71 = vector.load %arg6[%c0_40, %c0_41] : memref<2x8xf32, #tpu.memory_space<vmem>>, vector<2x8xf32>
      %cst_42 = arith.constant 0.000000e+00 : f32
      %72 = vector.broadcast %cst_42 : f32 to vector<2x8xf32>
      %73 = arith.maximumf %71, %72 : vector<2x8xf32>
      %74 = math.sqrt %73 : vector<2x8xf32>
      %75 = vector.shape_cast %74 : vector<2x8xf32> to vector<1x2x8xf32>
      %cst_43 = arith.constant dense<0.000000e+00> : vector<1xf32>
      %76 = vector.multi_reduction <add>, %75, %cst_43 [1, 2] : vector<1x2x8xf32> to vector<1xf32>
      %77 = vector.shape_cast %76 : vector<1xf32> to vector<1x1x1xf32>
      %78 = vector.extract %77[0, 0, 0] : f32 from vector<1x1x1xf32>
      %c0_44 = arith.constant 0 : index
      %c0_45 = arith.constant 0 : index
      %79 = vector.load %arg7[%c0_44, %c0_45] : memref<1x8xf32, #tpu.memory_space<vmem>>, vector<1x8xf32>
      %80 = vector.shape_cast %79 : vector<1x8xf32> to vector<1x1x8xf32>
      %cst_46 = arith.constant dense<0.000000e+00> : vector<1xf32>
      %81 = vector.multi_reduction <add>, %80, %cst_46 [1, 2] : vector<1x1x8xf32> to vector<1xf32>
      %82 = vector.shape_cast %81 : vector<1xf32> to vector<1x1x1xf32>
      %83 = vector.extract %82[0, 0, 0] : f32 from vector<1x1x1xf32>
      %84 = tpu.iota {dimensions = array<i32: 1>} : vector<8x128xi32>
      %c0_i32_47 = arith.constant 0 : i32
      %85 = vector.broadcast %c0_i32_47 : i32 to vector<8x128xi32>
      %86 = arith.cmpi eq, %84, %85 : vector<8x128xi32>
      %c0_48 = arith.constant 0 : index
      %c0_49 = arith.constant 0 : index
      %87 = vector.load %arg8[%c0_48, %c0_49] : memref<1x1xf32, #tpu.memory_space<vmem>>, vector<1x1xf32>
      %cst_50 = arith.constant 0.000000e+00 : f32
      %88 = vector.shape_cast %87 : vector<1x1xf32> to vector<1x1xf32>
      %89 = vector.broadcast %88 : vector<1x1xf32> to vector<8x128xf32>
      %90 = vector.broadcast %cst_50 : f32 to vector<8x128xf32>
      %91 = arith.select %86, %89, %90 : vector<8x128xi1>, vector<8x128xf32>
      %c1_i32_51 = arith.constant 1 : i32
      %92 = vector.broadcast %c1_i32_51 : i32 to vector<8x128xi32>
      %93 = arith.cmpi eq, %84, %92 : vector<8x128xi32>
      %cst_52 = arith.constant 0.000000e+00 : f32
      %94 = vector.broadcast %78 : f32 to vector<8x128xf32>
      %95 = vector.broadcast %cst_52 : f32 to vector<8x128xf32>
      %96 = arith.select %93, %94, %95 : vector<8x128xi1>, vector<8x128xf32>
      %97 = arith.addf %91, %96 : vector<8x128xf32>
      %c2_i32 = arith.constant 2 : i32
      %98 = vector.broadcast %c2_i32 : i32 to vector<8x128xi32>
      %99 = arith.cmpi eq, %84, %98 : vector<8x128xi32>
      %cst_53 = arith.constant 0.000000e+00 : f32
      %100 = vector.broadcast %83 : f32 to vector<8x128xf32>
      %101 = vector.broadcast %cst_53 : f32 to vector<8x128xf32>
      %102 = arith.select %99, %100, %101 : vector<8x128xi1>, vector<8x128xf32>
      %103 = arith.addf %97, %102 : vector<8x128xf32>
      %c0_54 = arith.constant 0 : index
      %c0_55 = arith.constant 0 : index
      %c0_56 = arith.constant 0 : index
      %104 = vector.load %arg5[%c0_54, %c0_55, %c0_56] : memref<1x8x128xf32, #tpu.memory_space<vmem>>, vector<1x8x128xf32>
      %105 = vector.shape_cast %104 : vector<1x8x128xf32> to vector<8x128xf32>
      %106 = vector.shape_cast %103 : vector<8x128xf32> to vector<1x8x128xf32>
      tpu.vector_store %arg5[%c0_54, %c0_55, %c0_56], %106 {strides = array<i32>} : memref<1x8x128xf32, #tpu.memory_space<vmem>>, vector<1x8x128xf32>,
    } else {
    }
    return
  }
  func.func @transform_0(%arg0: i32, %arg1: i32) -> (i32, i32, i32) {
    %c0_i32 = arith.constant 0 : i32
    %c0_i32_0 = arith.constant 0 : i32
    %c0_i32_1 = arith.constant 0 : i32
    return %c0_i32, %arg1, %c0_i32_0 : i32, i32, i32
  }
  func.func @transform_1(%arg0: i32, %arg1: i32) -> (i32, i32, i32) {
    %c0_i32 = arith.constant 0 : i32
    %c0_i32_0 = arith.constant 0 : i32
    %c0_i32_1 = arith.constant 0 : i32
    return %c0_i32, %arg0, %c0_i32_0 : i32, i32, i32
  }
  func.func @transform_2(%arg0: i32, %arg1: i32) -> (i32, i32, i32) {
    %c0_i32 = arith.constant 0 : i32
    %c0_i32_0 = arith.constant 0 : i32
    %c0_i32_1 = arith.constant 0 : i32
    return %c0_i32, %c0_i32_0, %arg0 : i32, i32, i32
  }
  func.func @transform_3(%arg0: i32, %arg1: i32) -> (i32, i32, i32) {
    %c0_i32 = arith.constant 0 : i32
    %c0_i32_0 = arith.constant 0 : i32
    %c0_i32_1 = arith.constant 0 : i32
    return %arg0, %c0_i32, %c0_i32_0 : i32, i32, i32
  }
}

</mosaic_0001>

<llo_original>
// kernel: tpu_custom_call.1
$region0: #{tpu_custom_call.1}
  #allocation0 [shape = 'u32[]', space=smem, size = 0x4, offset = 0x4, fixed_abs, tag = 'smem constant byte address 0x4 - core index']
  #allocation1 [shape = 'u32[72,128]{1,0:T(1,128)}', space=vmem, size = 0x9000, scoped, tag = 'internal scratch']
  #allocation2 [shape = 'f32[2,8]{1,0:T(2,128)}', space=vmem, size = 0x400, scoped, tag = 'scratch operand']
  #allocation3 [shape = 'f32[1,8]{1,0:T(1,128)}', space=vmem, size = 0x200, scoped, tag = 'scratch operand']
  #allocation4 [shape = 'f32[1,1]{1,0:T(1,128)}', space=vmem, size = 0x200, scoped, tag = 'scratch operand']
  %s0 = inlined_call_operand.hbm [shape: f32[2,8,32], index: 0, kind: input, shape index: {}]
  %s1 = inlined_call_operand.hbm [shape: f32[2,8,32], index: 1, kind: input, shape index: {}]
  %s2 = inlined_call_operand.hbm [shape: f32[2,1,8], index: 2, kind: input, shape index: {}]
  %s3 = inlined_call_operand.hbm [shape: f32[1,8,128], index: 3, kind: output, shape index: {}]
  %s4 = sld [smem:[#allocation0]]
  $region46: #{tpu_custom_call.1} parent=0
    _
  %s6 = ssub.s32 1, %s4
  %s7 = scalar_select 0, %s6, %s4
  $region1: #{tpu_custom_call.1} parent=0
    #allocation5 [shape = 'u8[8192]{0}', space=vmem, size = 0x2000, scoped, tag = 'input window, operand 0, single buffered']
    #allocation6 [shape = 's32[1]{0}', space=sflag, size = 0x4, scoped, tag = 'scoped memory for tpu_custom_call.1']
    #allocation7 [shape = 's32[1]{0}', space=sflag, size = 0x4, scoped, tag = 'scoped memory for tpu_custom_call.1']
    #allocation8 [shape = 'u8[8192]{0}', space=vmem, size = 0x2000, scoped, tag = 'input window, operand 1, single buffered']
    #allocation9 [shape = 's32[1]{0}', space=sflag, size = 0x4, scoped, tag = 'scoped memory for tpu_custom_call.1']
    #allocation10 [shape = 'u8[1024]{0}', space=vmem, size = 0x400, scoped, tag = 'input window, operand 2, single buffered']
    #allocation11 [shape = 'u8[4096]{0}', space=vmem, size = 0x1000, scoped, tag = 'output window, operand 0, single buffered']
    %8 = vsyncpa [#allocation6], 0
    %9 = vsyncpa [#allocation9], 0
    %10 = vsyncpa [#allocation7], 0
    // Predicated region
    $region2: #{tpu_custom_call.1} parent=1 // pred_check
      _
    $region3: #{tpu_custom_call.1} parent=1 // pred_check_branch
      %12 = sbr.rel (0) target = $region5
    $region4: #{tpu_custom_call.1} parent=1 // pred_region
      %14 = vsyncadd [#allocation6], 0
      %s15 = sshll.u32 %s0, 4
      %s16 = int_to_ptr.hbm [resolvable:$true] %s15
      %s17 = sshll.u32 [#allocation5], 4
      %s18 = int_to_ptr.vmem [resolvable:$true] %s17
      %23 = dma.hbm_to_vmem [thread:$0]  %s16, 256, %s18, [#allocation6], 128, 128, 8
    $region5: #{tpu_custom_call.1} parent=1 // pred_fallthru
      _
    // Predicated region
    $region6: #{tpu_custom_call.1} parent=1 // pred_check
      _
    $region7: #{tpu_custom_call.1} parent=1 // pred_check_branch
      %25 = sbr.rel (0) target = $region9
    $region8: #{tpu_custom_call.1} parent=1 // pred_region
      %27 = vsyncadd [#allocation9], 0
      %s28 = sshll.u32 %s1, 4
      %s29 = int_to_ptr.hbm [resolvable:$true] %s28
      %s30 = sshll.u32 [#allocation8], 4
      %s31 = int_to_ptr.vmem [resolvable:$true] %s30
      %36 = dma.hbm_to_vmem [thread:$0]  %s29, 256, %s31, [#allocation9], 128, 128, 8
    $region9: #{tpu_custom_call.1} parent=1 // pred_fallthru
      _
    // Predicated region
    $region10: #{tpu_custom_call.1} parent=1 // pred_check
      _
    $region11: #{tpu_custom_call.1} parent=1 // pred_check_branch
      %38 = sbr.rel (0) target = $region13
    $region12: #{tpu_custom_call.1} parent=1 // pred_region
      %40 = vsyncadd [#allocation9], 0
      %s41 = sshll.u32 %s2, 4
      %s42 = int_to_ptr.hbm [resolvable:$true] %s41
      %s43 = sshll.u32 [#allocation10], 4
      %s44 = int_to_ptr.vmem [resolvable:$true] %s43
      %49 = dma.hbm_to_vmem [thread:$0]  %s42, 32, %s44, [#allocation9], 16, 16, 1
    $region13: #{tpu_custom_call.1} parent=1 // pred_fallthru
      _
    // Predicated region
    $region14: #{tpu_custom_call.1} parent=1 // pred_check
      _
    $region15: #{tpu_custom_call.1} parent=1 // pred_check_branch
      %51 = sbr.rel (0) target = $region17
    $region16: #{tpu_custom_call.1} parent=1 // pred_region
      %53 = dma.done [#allocation6], 256
    $region17: #{tpu_custom_call.1} parent=1 // pred_fallthru
      _
    // Predicated region
    $region18: #{tpu_custom_call.1} parent=1 // pred_check
      _
    $region19: #{tpu_custom_call.1} parent=1 // pred_check_branch
      %55 = sbr.rel (0) target = $region21
    $region20: #{tpu_custom_call.1} parent=1 // pred_region
      %57 = dma.done [#allocation9], 256
    $region21: #{tpu_custom_call.1} parent=1 // pred_fallthru
      _
    // Predicated region
    $region22: #{tpu_custom_call.1} parent=1 // pred_check
      _
    $region23: #{tpu_custom_call.1} parent=1 // pred_check_branch
      %59 = sbr.rel (0) target = $region25
    $region24: #{tpu_custom_call.1} parent=1 // pred_region
      %61 = dma.done [#allocation9], 32
    $region25: #{tpu_custom_call.1} parent=1 // pred_fallthru
      _
    %p62 = scmp.eq.s32.totalorder 0, 0
    // Predicated region
    $region26: #{tpu_custom_call.1} parent=1 // pred_check
      %p63 = pneg %p62
    $region27: #{tpu_custom_call.1} parent=1 // pred_check_branch
      %65 = sbr.rel (%p63) target = $region29
    $region28: #{tpu_custom_call.1} parent=1 // pred_region
      %vm66 = vcmask 58368
      %67 = vst.msk [vmem:[#allocation2] sm:$0x3] %vm66, inf
      %vm68 = vcmask 57344
      %69 = vst.msk [vmem:[#allocation3] sm:$0x1] %vm68, 0.0
    $region29: #{tpu_custom_call.1} parent=1 // pred_fallthru
      _
    %v70 = vlaneseq
    %v71 = vshrl.u32 %v70, 7
    %v72 = vld [vmem:[#allocation5] sm:$0xff]
    %v73 = vld [vmem:[#allocation8] sm:$0xff]
    %vm74 = vcmask 261120
    %v76 = vsel %vm74, %v72, 0
    %v79 = vsel %vm74, %v73, 0
    %81 = vmatpush.xpose.msra.mxu0 0.0
    %82 = vmatpush.xpose.msra.mxu0 0.0
    %83 = vmatpush.xpose.msra.mxu0 0.0
    %84 = vmatpush.xpose.msra.mxu0 0.0
    %85 = vmatpush.xpose.msra.mxu0 0.0
    %86 = vmatpush.xpose.msra.mxu0 0.0
    %87 = vmatpush.xpose.msra.mxu0 0.0
    %88 = vmatpush.xpose.msra.mxu0 0.0
    %89 = vmatpush.xpose.msra.mxu0 0.0
    %90 = vmatpush.xpose.msra.mxu0 0.0
    %91 = vmatpush.xpose.msra.mxu0 0.0
    %92 = vmatpush.xpose.msra.mxu0 0.0
    %93 = vmatpush.xpose.msra.mxu0 0.0
    %94 = vmatpush.xpose.msra.mxu0 0.0
    %95 = vmatpush.xpose.msra.mxu0 0.0
    %96 = vmatpush.xpose.msra.mxu0 %v79
    %97 = vmatmul.f32.gmra.mxu0 %v76
    %v98 = vpop.f32.mrf.mxu0
    %v99 = vadd.f32 0.0, %v98
    %100 = vdwg.mxu0
    %v101 = vmul.f32 %v72, %v72
    %v102 = vsel %vm74, %v101, 0.0
    %103 = vadd.xlane.f32.xlu0 %v102
    %v104 = vpop.xlane.xlu0 %103
    %v105 = vld [vmem:[#allocation10] sm:$0x1]
    %v107 = vperm.slane %v105, 0
    %v109 = vadd.f32 %v104, %v107
    %v110 = vmul.f32 %v99, 2.0
    %v111 = vsub.f32 %v109, %v110
    %vm112 = vcmask 64512
    %v113 = vsel %vm112, %v111, inf
    %v114 = vrot.slane %v113, 4
    %v115 = vmin.f32 %v113, %v114
    %v116 = vrot.slane %v115, 2
    %v117 = vmin.f32 %v115, %v116
    %v118 = vrot.slane %v117, 1
    %v119 = vmin.f32 %v117, %v118
    %vm120 = vcmp.eq.s32.totalorder %v71, 0
    %v121 = vsel %vm120, %v119, inf
    %s122 = scalar_lea.vmem [#allocation5], 8
    %v123 = vld [vmem:[%s122] sm:$0xff]
    %s124 = scalar_lea.vmem [#allocation8], 8
    %v125 = vld [vmem:[%s124] sm:$0xff]
    %v127 = vsel %vm74, %v123, 0
    %v130 = vsel %vm74, %v125, 0
    %132 = vmatpush.xpose.msra.mxu0 0.0
    %133 = vmatpush.xpose.msra.mxu0 0.0
    %134 = vmatpush.xpose.msra.mxu0 0.0
    %135 = vmatpush.xpose.msra.mxu0 0.0
    %136 = vmatpush.xpose.msra.mxu0 0.0
    %137 = vmatpush.xpose.msra.mxu0 0.0
    %138 = vmatpush.xpose.msra.mxu0 0.0
    %139 = vmatpush.xpose.msra.mxu0 0.0
    %140 = vmatpush.xpose.msra.mxu0 0.0
    %141 = vmatpush.xpose.msra.mxu0 0.0
    %142 = vmatpush.xpose.msra.mxu0 0.0
    %143 = vmatpush.xpose.msra.mxu0 0.0
    %144 = vmatpush.xpose.msra.mxu0 0.0
    %145 = vmatpush.xpose.msra.mxu0 0.0
    %146 = vmatpush.xpose.msra.mxu0 0.0
    %147 = vmatpush.xpose.msra.mxu0 %v130
    %148 = vmatmul.f32.gmra.mxu0 %v127
    %v149 = vpop.f32.mrf.mxu0
    %v150 = vadd.f32 0.0, %v149
    %151 = vdwg.mxu0
    %v152 = vmul.f32 %v123, %v123
    %v153 = vsel %vm74, %v152, 0.0
    %154 = vadd.xlane.f32.xlu0 %v153
    %v155 = vpop.xlane.xlu0 %154
    %s156 = scalar_lea.vmem [#allocation10], 1
    %v157 = vld [vmem:[%s156] sm:$0x1]
    %v159 = vperm.slane %v157, 0
    %v161 = vadd.f32 %v155, %v159
    %v162 = vmul.f32 %v150, 2.0
    %v163 = vsub.f32 %v161, %v162
    %v164 = vmin.f32 %v111, %v163
    %v165 = vsel %vm112, %v163, inf
    %v166 = vrot.slane %v165, 4
    %v167 = vmin.f32 %v165, %v166
    %v168 = vrot.slane %v167, 2
    %v169 = vmin.f32 %v167, %v168
    %v170 = vrot.slane %v169, 1
    %v171 = vmin.f32 %v169, %v170
    %vm172 = vcmp.eq.s32.totalorder %v71, 1
    %v173 = vsel %vm172, %v171, %v121
    %v174 = vld [vmem:[#allocation3] sm:$0x1]
    %v175 = vmax.f32 %v164, 0.0
    %v176 = vrsqrt.pop %v175
    %v177 = vmul.f32 %v176, %v175
    %v178 = vmul.f32 %v177, %v176
    %v179 = vmul.f32 0.5, %v178
    %v180 = vsub.f32 1.5, %v179
    %v181 = vmul.f32 %v176, %v180
    %v182 = vmul.f32 %v175, %v181
    %vm183 = vcmp.eq.f32.partialorder %v175, inf
    %v184 = vsel %vm183, %v175, %v182
    %vm185 = vcmp.eq.f32.partialorder %v175, 0.0
    %v186 = vand.u32 %v175, 2147483648
    %v187 = vsel %vm185, %v186, %v184
    %v188 = vsel %vm112, %v187, 0.0
    %v189 = vrot.slane %v188, 4
    %v190 = vadd.f32 %v188, %v189
    %v191 = vrot.slane %v190, 2
    %v192 = vadd.f32 %v190, %v191
    %v193 = vrot.slane %v192, 1
    %v194 = vadd.f32 %v192, %v193
    %v195 = vadd.f32 %v174, %v194
    %vm196 = vcmask 57344
    %197 = vst.msk [vmem:[#allocation3] sm:$0x1] %vm196, %v195
    %v198 = vld [vmem:[#allocation2] sm:$0x3]
    %v199 = vmin.f32 %v198, %v173
    %vm200 = vcmask 58368
    %201 = vst.msk [vmem:[#allocation2] sm:$0x3] %vm200, %v199
    %p202 = scmp.eq.s32.totalorder 0, 0
    // Predicated region
    $region30: #{tpu_custom_call.1} parent=1 // pred_check
      %p203 = pneg %p202
    $region31: #{tpu_custom_call.1} parent=1 // pred_check_branch
      %205 = sbr.rel (%p203) target = $region33
    $region32: #{tpu_custom_call.1} parent=1 // pred_region
      %v206 = vld [vmem:[#allocation5] sm:$0xff]
      %v207 = vld [vmem:[#allocation5 + $0x8] sm:$0xff]
      %v208 = vld [vmem:[#allocation8] sm:$0xff]
      %v209 = vld [vmem:[#allocation8 + $0x8] sm:$0xff]
      %v210 = vsub.f32 %v206, %v208
      %v211 = vsub.f32 %v207, %v209
      %v212 = vand.u32 2147483647, %v210
      %v213 = vand.u32 2147483647, %v211
      %v214 = vsel %vm74, %v212, 0.0
      %v215 = vsel %vm74, %v213, 0.0
      %v216 = vadd.f32 %v214, %v215
      %v217 = vsel %vm74, %v216, 0.0
      %218 = vadd.xlane.f32.xlu0 %v217
      %v219 = vpop.xlane.xlu0 %218
      %v220 = vrot.slane %v219, 4
      %v221 = vadd.f32 %v219, %v220
      %v222 = vrot.slane %v221, 2
      %v223 = vadd.f32 %v221, %v222
      %v224 = vrot.slane %v223, 1
      %v225 = vadd.f32 %v223, %v224
      %s226 = vtos %v225
      %v227 = vstv %s226
      %vm228 = vcmask 0
      %229 = vst.msk [vmem:[#allocation4] sm:$0x1] %vm228, %v227
    $region33: #{tpu_custom_call.1} parent=1 // pred_fallthru
      _
    // Predicated region
    $region34: #{tpu_custom_call.1} parent=1 // pred_check
      %p230 = pneg %p62
    $region35: #{tpu_custom_call.1} parent=1 // pred_check_branch
      %232 = sbr.rel (%p230) target = $region37
    $region36: #{tpu_custom_call.1} parent=1 // pred_region
      %v233 = vld [vmem:[#allocation2] sm:$0x3]
      %v234 = vmax.f32 %v233, 0.0
      %v235 = vrsqrt.pop %v234
      %v236 = vmul.f32 %v235, %v234
      %v237 = vmul.f32 %v236, %v235
      %v238 = vmul.f32 0.5, %v237
      %v239 = vsub.f32 1.5, %v238
      %v240 = vmul.f32 %v235, %v239
      %v241 = vmul.f32 %v234, %v240
      %vm242 = vcmp.eq.f32.partialorder %v234, inf
      %v243 = vsel %vm242, %v234, %v241
      %vm244 = vcmp.eq.f32.partialorder %v234, 0.0
      %v245 = vand.u32 %v234, 2147483648
      %v246 = vsel %vm244, %v245, %v243
      %v247 = vsel %vm200, %v246, 0.0
      %248 = vadd.xlane.f32.xlu0 %v247
      %v249 = vpop.xlane.xlu0 %248
      %v250 = vrot.slane %v249, 4
      %v251 = vadd.f32 %v249, %v250
      %v252 = vrot.slane %v251, 2
      %v253 = vadd.f32 %v251, %v252
      %v254 = vrot.slane %v253, 1
      %v255 = vadd.f32 %v253, %v254
      %s256 = vtos %v255
      %v257 = vld [vmem:[#allocation3] sm:$0x1]
      %v258 = vsel %vm196, %v257, 0.0
      %259 = vadd.xlane.f32.xlu0 %v258
      %v260 = vpop.xlane.xlu0 %259
      %v261 = vrot.slane %v260, 4
      %v262 = vadd.f32 %v260, %v261
      %v263 = vrot.slane %v262, 2
      %v264 = vadd.f32 %v262, %v263
      %v265 = vrot.slane %v264, 1
      %v266 = vadd.f32 %v264, %v265
      %s267 = vtos %v266
      %v268 = vlaneseq
      %v269 = vand.u32 %v268, 127
      %vm270 = vcmp.eq.s32.totalorder %v269, 0
      %v271 = vld [vmem:[#allocation4] sm:$0x1]
      %v273 = vperm.slane %v271, 0
      %274 = vset.pattern.permute.xlu0 0
      %275 = vperm.xlu0 %274, %v273
      %v276 = vpop.permute.xlu0 %275
      %v278 = vsel %vm270, %v276, 0.0
      %vm279 = vcmp.eq.s32.totalorder %v269, 1
      %v280 = vstv %s256
      %v281 = vsel %vm279, %v280, 0.0
      %v282 = vadd.f32 %v278, %v281
      %vm283 = vcmp.eq.s32.totalorder %v269, 2
      %v284 = vstv %s267
      %v285 = vsel %vm283, %v284, 0.0
      %v286 = vadd.f32 %v282, %v285
      %287 = vst [vmem:[#allocation11] sm:$0xff] %v286
    $region37: #{tpu_custom_call.1} parent=1 // pred_fallthru
      _
    // Predicated region
    $region38: #{tpu_custom_call.1} parent=1 // pred_check
      _
    $region39: #{tpu_custom_call.1} parent=1 // pred_check_branch
      %289 = sbr.rel (0) target = $region41
    $region40: #{tpu_custom_call.1} parent=1 // pred_region
      %291 = vsyncadd [#allocation7], 0
      %s293 = sshll.u32 [#allocation11], 4
      %s294 = int_to_ptr.vmem [resolvable:$true] %s293
      %s295 = sshll.u32 %s3, 4
      %s296 = int_to_ptr.hbm [resolvable:$true] %s295
      %298 = dma.vmem_to_hbm [thread:$0]  %s294, 128, %s296, [#allocation7]
    $region41: #{tpu_custom_call.1} parent=1 // pred_fallthru
      _
    // Predicated region
    $region42: #{tpu_custom_call.1} parent=1 // pred_check
      _
    $region43: #{tpu_custom_call.1} parent=1 // pred_check_branch
      %300 = sbr.rel (0) target = $region45
    $region44: #{tpu_custom_call.1} parent=1 // pred_region
      %302 = dma.done [#allocation7], 128
    $region45: #{tpu_custom_call.1} parent=1 // pred_fallthru
      _
    %303 = vsyncpa [#allocation6], 1
    %304 = vsyncpa [#allocation9], 1
    %305 = vsyncpa [#allocation7], 1

</llo_original>
